<compile_context>
chip_gen: v5e
topology: v5e:2x2
jax: 0.10.0
libtpu: 0.0.40
codegen_flags: <defaults>
</compile_context>

<pallas_src>
import functools

import jax
import jax.numpy as jnp
from jax import lax
from jax.experimental import pallas as pl
from jax.experimental.pallas import tpu as pltpu

block_size = 8   # T
n_embd = 32      # C
head_size = 16   # H
B = 2


def head_kernel(x_ref, w_ref, o_ref, *, H, T, scale):
    # x_ref: (T, C) for one batch element (batch dim squeezed by BlockSpec);
    # w_ref: (C, 3H) fused [q|k|v] weights; o_ref: (T, H).
    x = x_ref[...]                                   # (T, C), f32
    w = w_ref[...]                                   # (C, 3H)

    # One fused QKV projection: single MXU push instead of three tiny ones.
    qkv = jnp.dot(x, w, preferred_element_type=jnp.float32)   # (T, 3H)
    # TODO(synk): slice offsets (H, 2H) are not 128-lane aligned; only fixable
    # by fusing multiple heads so each Q/K/V segment is a multiple of 128.
    q = qkv[:, :H] * scale      # fold 1/sqrt(C) into the small (T, H) tile
    k = qkv[:, H:2 * H]
    v = qkv[:, 2 * H:]

    # Per-batch causal scores: (T, T) only, no cross-batch waste.
    s = lax.dot_general(q, k, (((1,), (1,)), ((), ())),
                        preferred_element_type=jnp.float32)   # (T, T)

    # Causal mask generated in-kernel (no HBM mask buffer).  Large finite
    # negative avoids inf-inf hazards; every row keeps its diagonal so the
    # row max stays finite and masked entries underflow to exactly 0.
    row = lax.broadcasted_iota(jnp.int32, (T, T), 0)
    col = lax.broadcasted_iota(jnp.int32, (T, T), 1)
    s = jnp.where(col <= row, s, -1e30)

    # Softmax in f32; exact reciprocal on the tiny (T, 1) denominator.
    m = jnp.max(s, axis=-1, keepdims=True)
    e = jnp.exp(s - m)
    denom = jnp.sum(e, axis=-1, keepdims=True)
    p = e * pl.reciprocal(denom, approx=False)

    # TODO(synk): output last dim is H=16 (<128 lanes) -> masked stores; true
    # lane-dense stores require fusing >=8 heads into one kernel (out of scope
    # for this single-Head module).
    o_ref[...] = jnp.dot(p, v,
                         preferred_element_type=jnp.float32).astype(o_ref.dtype)


def fuse_qkv_weights(wq, wk, wv):
    # Hoisted fusion: call once at parameter setup, not per forward.
    return jnp.concatenate([wq, wk, wv], axis=1)   # (C, 3H)


@jax.jit
def head_forward(x, w_qkv):
    Bn, T, C = x.shape
    H = w_qkv.shape[1] // 3
    scale = C ** (-0.5)

    kernel = functools.partial(head_kernel, H=H, T=T, scale=scale)

    out = pl.pallas_call(
        kernel,
        out_shape=jax.ShapeDtypeStruct((Bn, T, H), jnp.float32),
        grid=(Bn,),
        in_specs=[
            # Batch dim squeezed; each grid point sees one (T, C) tile.
            pl.BlockSpec((None, T, C), lambda b: (b, 0, 0)),
            # Weights: same block every step -> stays resident in VMEM.
            pl.BlockSpec((C, 3 * H), lambda b: (0, 0)),
        ],
        out_specs=pl.BlockSpec((None, T, H), lambda b: (b, 0, 0)),
        compiler_params=pltpu.CompilerParams(
            dimension_semantics=("parallel",)),
    )(x, w_qkv)

    return out


def head_reference(x, wk, wq, wv):
    # Pure-JAX reference mirroring the PyTorch forward.
    Bn, T, C = x.shape
    k = x @ wk
    q = x @ wq
    v = x @ wv
    w = (q @ jnp.swapaxes(k, -2, -1)) * (C ** -0.5)
    tril = jnp.tril(jnp.ones((T, T)))
    w = jnp.where(tril == 0, -jnp.inf, w)
    w = jax.nn.softmax(w, axis=-1)
    return w @ v


if __name__ == "__main__":
    key = jax.random.PRNGKey(0)
    kx, kk, kq, kv = jax.random.split(key, 4)

    x = jax.random.normal(kx, (B, block_size, n_embd), dtype=jnp.float32)

    # Deterministic synthetic weights; stored as (C, H) = (in, out).
    bound = 1.0 / (n_embd ** 0.5)
    wk = jax.random.uniform(kk, (n_embd, head_size), jnp.float32, -bound, bound)
    wq = jax.random.uniform(kq, (n_embd, head_size), jnp.float32, -bound, bound)
    wv = jax.random.uniform(kv, (n_embd, head_size), jnp.float32, -bound, bound)

    # Fuse once at setup (not per forward call).
    w_qkv = fuse_qkv_weights(wq, wk, wv)

    out = head_forward(x, w_qkv)
    jax.block_until_ready(out)

    ref = head_reference(x, wk, wq, wv)
    assert out.shape == (B, block_size, head_size)
    assert jnp.allclose(out, ref, atol=1e-4, rtol=1e-4), "mismatch vs reference"

    print("KERNEL_OK")
</pallas_src>

<mosaic_0001>
module attributes {stable_mosaic.version = 11 : i64} {
  func.func @head_kernel(%arg0: i32, %arg1: memref<1x8x32xf32, #tpu.memory_space<vmem>>, %arg2: memref<32x48xf32, #tpu.memory_space<vmem>>, %arg3: memref<1x8x16xf32, #tpu.memory_space<vmem>>) attributes {dimension_semantics = [#tpu.dimension_semantics<parallel>], iteration_bounds = array<i64: 2>, scalar_prefetch = 0 : i64, scratch_operands = 0 : i64, tpu.core_type = #tpu.core_type<tc>, window_params = [{transform_indices = @transform_0, window_bounds = array<i64: 1, 8, 32>}, {pipeline_mode = #tpu.pipeline_mode<synchronous>, transform_indices = @transform_1, window_bounds = array<i64: 32, 48>}, {transform_indices = @transform_2, window_bounds = array<i64: 1, 8, 16>}]} {
    %c0 = arith.constant 0 : index
    %c0_0 = arith.constant 0 : index
    %c0_1 = arith.constant 0 : index
    %0 = vector.load %arg1[%c0, %c0_0, %c0_1] : memref<1x8x32xf32, #tpu.memory_space<vmem>>, vector<1x8x32xf32>
    %1 = vector.shape_cast %0 : vector<1x8x32xf32> to vector<8x32xf32>
    %c0_2 = arith.constant 0 : index
    %c0_3 = arith.constant 0 : index
    %2 = vector.load %arg2[%c0_2, %c0_3] : memref<32x48xf32, #tpu.memory_space<vmem>>, vector<32x48xf32>
    %cst = arith.constant dense<0.000000e+00> : vector<8x48xf32>
    %3 = tpu.matmul %1, %2, %cst {dimension_numbers = #tpu.dot_dimension_numbers<[1], [0], [0], [1], [0, 0, 1, 1], [], []>} : vector<8x32xf32>, vector<32x48xf32>, vector<8x48xf32> -> vector<8x48xf32>
    %4 = vector.extract_strided_slice %3 {offsets = [0, 0], sizes = [8, 16], strides = [1, 1]} : vector<8x48xf32> to vector<8x16xf32>
    %cst_4 = arith.constant 0.176776692 : f32
    %5 = vector.broadcast %cst_4 : f32 to vector<8x16xf32>
    %6 = arith.mulf %4, %5 : vector<8x16xf32>
    %7 = vector.extract_strided_slice %3 {offsets = [0, 16], sizes = [8, 16], strides = [1, 1]} : vector<8x48xf32> to vector<8x16xf32>
    %8 = vector.extract_strided_slice %3 {offsets = [0, 32], sizes = [8, 16], strides = [1, 1]} : vector<8x48xf32> to vector<8x16xf32>
    %cst_5 = arith.constant dense<0.000000e+00> : vector<8x8xf32>
    %9 = tpu.matmul %6, %7, %cst_5 {dimension_numbers = #tpu.dot_dimension_numbers<[1], [1], [0], [0], [0, 0, 1, 0], [], []>} : vector<8x16xf32>, vector<8x16xf32>, vector<8x8xf32> -> vector<8x8xf32>
    %10 = tpu.iota {dimensions = array<i32: 0>} : vector<8x8xi32>
    %11 = tpu.iota {dimensions = array<i32: 1>} : vector<8x8xi32>
    %12 = arith.cmpi sle, %11, %10 : vector<8x8xi32>
    %cst_6 = arith.constant -1.000000e+30 : f32
    %13 = vector.broadcast %cst_6 : f32 to vector<8x8xf32>
    %14 = arith.select %12, %9, %13 : vector<8x8xi1>, vector<8x8xf32>
    %cst_7 = arith.constant dense<0xFF800000> : vector<8xf32>
    %15 = vector.multi_reduction <maximumf>, %14, %cst_7 [1] : vector<8x8xf32> to vector<8xf32>
    %16 = vector.shape_cast %15 : vector<8xf32> to vector<8x1xf32>
    %17 = vector.broadcast %16 : vector<8x1xf32> to vector<8x8xf32>
    %18 = arith.subf %14, %17 : vector<8x8xf32>
    %19 = math.exp %18 : vector<8x8xf32>
    %cst_8 = arith.constant dense<0.000000e+00> : vector<8xf32>
    %20 = vector.multi_reduction <add>, %19, %cst_8 [1] : vector<8x8xf32> to vector<8xf32>
    %21 = vector.shape_cast %20 : vector<8xf32> to vector<8x1xf32>
    %22 = tpu.reciprocal %21 : vector<8x1xf32> -> vector<8x1xf32>
    %23 = vector.broadcast %22 : vector<8x1xf32> to vector<8x8xf32>
    %24 = arith.mulf %19, %23 : vector<8x8xf32>
    %cst_9 = arith.constant dense<0.000000e+00> : vector<8x16xf32>
    %25 = tpu.matmul %24, %8, %cst_9 {dimension_numbers = #tpu.dot_dimension_numbers<[1], [0], [0], [1], [0, 0, 1, 1], [], []>} : vector<8x8xf32>, vector<8x16xf32>, vector<8x16xf32> -> vector<8x16xf32>
    %c0_10 = arith.constant 0 : index
    %c0_11 = arith.constant 0 : index
    %c0_12 = arith.constant 0 : index
    %26 = vector.load %arg3[%c0_10, %c0_11, %c0_12] : memref<1x8x16xf32, #tpu.memory_space<vmem>>, vector<1x8x16xf32>
    %27 = vector.shape_cast %26 : vector<1x8x16xf32> to vector<8x16xf32>
    %28 = vector.shape_cast %25 : vector<8x16xf32> to vector<1x8x16xf32>
    tpu.vector_store %arg3[%c0_10, %c0_11, %c0_12], %28 {strides = array<i32>} : memref<1x8x16xf32, #tpu.memory_space<vmem>>, vector<1x8x16xf32>,
    return
  }
  func.func @transform_0(%arg0: i32) -> (i32, i32, i32) {
    %c0_i32 = arith.constant 0 : i32
    %c0_i32_0 = arith.constant 0 : i32
    %c0_i32_1 = arith.constant 0 : i32
    return %arg0, %c0_i32, %c0_i32_0 : i32, i32, i32
  }
  func.func @transform_1(%arg0: i32) -> (i32, i32) {
    %c0_i32 = arith.constant 0 : i32
    %c0_i32_0 = arith.constant 0 : i32
    %c0_i32_1 = arith.constant 0 : i32
    return %c0_i32, %c0_i32_0 : i32, i32
  }
  func.func @transform_2(%arg0: i32) -> (i32, i32, i32) {
    %c0_i32 = arith.constant 0 : i32
    %c0_i32_0 = arith.constant 0 : i32
    %c0_i32_1 = arith.constant 0 : i32
    return %arg0, %c0_i32, %c0_i32_0 : i32, i32, i32
  }
}

</mosaic_0001>

<llo_original>
// kernel: head_forward.1
$region0: #{head_forward.1}
  #allocation0 [shape = 'u32[]', space=smem, size = 0x4, offset = 0x4, fixed_abs, tag = 'smem constant byte address 0x4 - core index']
  #allocation1 [shape = 'u32[72,128]{1,0:T(1,128)}', space=vmem, size = 0x9000, scoped, tag = 'internal scratch']
  %s0 = inlined_call_operand.hbm [shape: f32[2,8,32], index: 0, kind: input, shape index: {}]
  %s1 = inlined_call_operand.hbm [shape: f32[32,48], index: 1, kind: input, shape index: {}]
  %s2 = inlined_call_operand.hbm [shape: f32[2,8,16], index: 2, kind: output, shape index: {}]
  %s3 = sld [smem:[#allocation0]]
  $region49: #{head_forward.1} parent=0
    _
  %s5 = ssub.s32 1, %s3
  %s6 = scalar_select 0, %s5, %s3
  $region1: #{head_forward.1} parent=0
    #allocation2 [shape = 'u8[8192]{0}', space=vmem, size = 0x2000, scoped, tag = 'input window, operand 0']
    #allocation3 [shape = 's32[2]{0}', space=sflag, size = 0x8, scoped, tag = 'scoped memory for head_forward.1']
    #allocation4 [shape = 's32[2]{0}', space=sflag, size = 0x8, scoped, tag = 'scoped memory for head_forward.1']
    #allocation5 [shape = 'u8[16384]{0}', space=vmem, size = 0x4000, scoped, tag = 'input window, operand 1, single buffered']
    #allocation6 [shape = 's32[1]{0}', space=sflag, size = 0x4, scoped, tag = 'scoped memory for head_forward.1']
    #allocation7 [shape = 'u8[8192]{0}', space=vmem, size = 0x2000, scoped, tag = 'output window, operand 0']
    %7 = vsyncpa [#allocation3], 0
    %s8 = scalar_lea.sflag [#allocation3], 1
    %9 = vsyncpa %s8, 0
    %10 = vsyncpa [#allocation6], 0
    %11 = vsyncpa [#allocation4], 0
    %s12 = scalar_lea.sflag [#allocation4], 1
    %13 = vsyncpa %s12, 0
    loop: start=0, step=1, limit=4
    $region2: #{head_forward.1} parent=1 // loop_pre_header
      _
    $region3: #{head_forward.1} parent=1 // loop_header
      %s15 = sphi 0, %s19
      %p16 = scmp.ge.s32.totalorder %s15, 4
      %s25 = sphi 0, %s27
      %s28 = sphi 0, %s25
      %s29 = sphi 0, %s28
      %s45 = sphi 0, %s29
      %s49 = sphi 0, %s49
      %s51 = sphi 0, %s49
      %s52 = sphi 0, %s51
      %s66 = sphi 0, %s52
      %s72 = sphi 0, %s74
      %s75 = sphi 0, %s72
      %s76 = sphi 0, %s75
      %s92 = sphi 0, %s76
    $region4: #{head_forward.1} parent=1 // loop_header_branch
      %18 = sbr.rel (%p16) target = $region8
    $region5: #{head_forward.1} parent=1 // loop_body
      %s20 = ssub.s32 %s15, 1
      %s21 = ssub.s32 %s15, 2
      %s22 = sadd.s32 %s15, 1
      %s23 = ssub.s32 %s15, %s22
      %p24 = scmp.eq.s32.totalorder %s23, 0
      %s26 = sadd.s32 %s25, 1
      %s27 = scalar_select %p24, %s25, %s26
      %p30 = pneg %p24
      %p31 = scmp.eq.s32.totalorder %s15, 1
      %p32 = por %p30, %p31
      %p33 = scmp.ne.s32.totalorder %s25, %s28
      %p34 = scmp.eq.s32.totalorder %s15, 0
      %p35 = por %p33, %p34
      %p36 = scmp.ne.s32.totalorder %s25, %s28
      %p37 = scmp.eq.s32.totalorder %s20, 1
      %p38 = por %p36, %p37
      %p39 = scmp.ne.s32.totalorder %s28, %s29
      %p40 = scmp.eq.s32.totalorder %s20, 0
      %p41 = por %p39, %p40
      %p42 = scmp.ne.s32.totalorder %s28, %s29
      %p43 = scmp.eq.s32.totalorder %s21, 1
      %p44 = por %p42, %p43
      %p46 = scmp.ne.s32.totalorder %s29, %s45
      %p47 = scmp.eq.s32.totalorder %s21, 0
      %p48 = por %p46, %p47
      %s50 = sadd.s32 %s49, 1
      %p53 = scmp.eq.s32.totalorder %s15, 1
      %p54 = scmp.ne.s32.totalorder %s49, %s51
      %p55 = scmp.eq.s32.totalorder %s15, 0
      %p56 = por %p54, %p55
      %p57 = scmp.ne.s32.totalorder %s49, %s51
      %p58 = scmp.eq.s32.totalorder %s20, 1
      %p59 = por %p57, %p58
      %p60 = scmp.ne.s32.totalorder %s51, %s52
      %p61 = scmp.eq.s32.totalorder %s20, 0
      %p62 = por %p60, %p61
      %p63 = scmp.ne.s32.totalorder %s51, %s52
      %p64 = scmp.eq.s32.totalorder %s21, 1
      %p65 = por %p63, %p64
      %p67 = scmp.ne.s32.totalorder %s52, %s66
      %p68 = scmp.eq.s32.totalorder %s21, 0
      %p69 = por %p67, %p68
      %s70 = ssub.s32 %s15, %s22
      %p71 = scmp.eq.s32.totalorder %s70, 0
      %s73 = sadd.s32 %s72, 1
      %s74 = scalar_select %p71, %s72, %s73
      %p77 = pneg %p71
      %p78 = scmp.eq.s32.totalorder %s15, 1
      %p79 = por %p77, %p78
      %p80 = scmp.ne.s32.totalorder %s72, %s75
      %p81 = scmp.eq.s32.totalorder %s15, 0
      %p82 = por %p80, %p81
      %p83 = scmp.ne.s32.totalorder %s72, %s75
      %p84 = scmp.eq.s32.totalorder %s20, 1
      %p85 = por %p83, %p84
      %p86 = scmp.ne.s32.totalorder %s75, %s76
      %p87 = scmp.eq.s32.totalorder %s20, 0
      %p88 = por %p86, %p87
      %p89 = scmp.ne.s32.totalorder %s75, %s76
      %p90 = scmp.eq.s32.totalorder %s21, 1
      %p91 = por %p89, %p90
      %p93 = scmp.ne.s32.totalorder %s76, %s92
      %p94 = scmp.eq.s32.totalorder %s21, 0
      %p95 = por %p93, %p94
      %p96 = scmp.le.s32.totalorder 1, %s15
      %p97 = scmp.lt.s32.totalorder %s15, 3
      %p98 = pnand %p96, %p97
      %p99 = pneg %p98
      // Predicated region
      $region9: #{head_forward.1} parent=5 // pred_check
        _
      $region10: #{head_forward.1} parent=5 // pred_check_branch
        %101 = sbr.rel (%p98) target = $region12
      $region11: #{head_forward.1} parent=5 // pred_region
        %s102 = ssub.s32 %s15, 1
        // Predicated region
        $region13: #{head_forward.1} parent=11 // pred_check
          %p103 = pneg %p62
        $region14: #{head_forward.1} parent=11 // pred_check_branch
          %105 = sbr.rel (%p103) target = $region16
        $region15: #{head_forward.1} parent=11 // pred_region
          %107 = vsyncadd [#allocation6], 0
          %s108 = sshll.u32 %s1, 4
          %s109 = int_to_ptr.hbm [resolvable:$true] %s108
          %s110 = sshll.u32 [#allocation5], 4
          %s111 = int_to_ptr.vmem [resolvable:$true] %s110
          %116 = dma.hbm_to_vmem [thread:$0]  %s109, 512, %s111, [#allocation6], 128, 128, 8
        $region16: #{head_forward.1} parent=11 // pred_fallthru
          _
      $region12: #{head_forward.1} parent=5 // pred_fallthru
        _
      %p117 = scmp.lt.s32.totalorder %s15, 2
      // Predicated region
      $region17: #{head_forward.1} parent=5 // pred_check
        %p118 = pneg %p117
      $region18: #{head_forward.1} parent=5 // pred_check_branch
        %120 = sbr.rel (%p118) target = $region20
      $region19: #{head_forward.1} parent=5 // pred_region
        // Predicated region
        $region21: #{head_forward.1} parent=19 // pred_check
          %p121 = pneg %p35
        $region22: #{head_forward.1} parent=19 // pred_check_branch
          %123 = sbr.rel (%p121) target = $region24
        $region23: #{head_forward.1} parent=19 // pred_region
          %s124 = sand.u32 %s25, 1
          %s125 = scalar_lea.sflag [#allocation3], %s124
          %s126 = sand.u32 %s25, 1
          %s127 = smul.addr %s126, 8
          %s128 = scalar_lea.vmem [#allocation2], %s127
          %130 = vsyncadd %s125, 0
          %s131 = smul.addr %s15, 8
          %s132 = scalar_lea.hbm %s0, %s131
          %s134 = sshll.u32 %s132, 4
          %s135 = int_to_ptr.hbm [resolvable:$true] %s134
          %s136 = sshll.u32 %s128, 4
          %s137 = int_to_ptr.vmem [resolvable:$true] %s136
          %139 = dma.hbm_to_vmem [thread:$0]  %s135, 128, %s137, %s125
        $region24: #{head_forward.1} parent=19 // pred_fallthru
          _
      $region20: #{head_forward.1} parent=5 // pred_fallthru
        _
      %p140 = scmp.le.s32.totalorder 1, %s15
      %p141 = scmp.lt.s32.totalorder %s15, 3
      %p142 = pnand %p140, %p141
      %p143 = pneg %p142
      // Predicated region
      $region25: #{head_forward.1} parent=5 // pred_check
        _
      $region26: #{head_forward.1} parent=5 // pred_check_branch
        %145 = sbr.rel (%p142) target = $region28
      $region27: #{head_forward.1} parent=5 // pred_region
        %s146 = ssub.s32 %s15, 1
        %s147 = sand.u32 %s28, 1
        %s148 = scalar_lea.sflag [#allocation3], %s147
        %s149 = sand.u32 %s28, 1
        %s150 = smul.addr %s149, 8
        %s151 = scalar_lea.vmem [#allocation2], %s150
        // Predicated region
        $region29: #{head_forward.1} parent=27 // pred_check
          %p152 = pneg %p41
        $region30: #{head_forward.1} parent=27 // pred_check_branch
          %154 = sbr.rel (%p152) target = $region32
        $region31: #{head_forward.1} parent=27 // pred_region
          %156 = dma.done %s148, 128
        $region32: #{head_forward.1} parent=27 // pred_fallthru
          _
        // Predicated region
        $region33: #{head_forward.1} parent=27 // pred_check
          %p157 = pneg %p62
        $region34: #{head_forward.1} parent=27 // pred_check_branch
          %159 = sbr.rel (%p157) target = $region36
        $region35: #{head_forward.1} parent=27 // pred_region
          %161 = dma.done [#allocation6], 512
        $region36: #{head_forward.1} parent=27 // pred_fallthru
          _
        %s162 = sand.u32 %s28, 1
        %s163 = scalar_lea.sflag [#allocation3], %s162
        %s164 = sand.u32 %s28, 1
        %s165 = smul.addr %s164, 8
        %s166 = scalar_lea.vmem [#allocation2], %s165
        %p167 = pneg %p41
        %p168 = pneg %p38
        %p169 = pneg %p62
        %p170 = pneg %p59
        %p171 = pneg %p88
        %p172 = pneg %p85
        %s173 = sand.u32 %s75, 1
        %s174 = scalar_lea.sflag [#allocation4], %s173
        %s175 = sand.u32 %s75, 1
        %s176 = smul.addr %s175, 8
        %s177 = scalar_lea.vmem [#allocation7], %s176
        %v178 = vld [vmem:[%s151] sm:$0xff]
        %v179 = vld [vmem:[#allocation5] sm:$0xff]
        %v180 = vld [vmem:[#allocation5 + $0x8] sm:$0xff]
        %v181 = vld [vmem:[#allocation5 + $0x10] sm:$0xff]
        %v182 = vld [vmem:[#allocation5 + $0x18] sm:$0xff]
        %vm183 = vcmask 261120
        %v185 = vsel %vm183, %v178, 0
        %187 = vmatpush.msra.mxu0 0.0
        %188 = vmatpush.msra.mxu0 0.0
        %189 = vmatpush.msra.mxu0 0.0
        %190 = vmatpush.msra.mxu0 0.0
        %191 = vmatpush.msra.mxu0 0.0
        %192 = vmatpush.msra.mxu0 0.0
        %193 = vmatpush.msra.mxu0 0.0
        %194 = vmatpush.msra.mxu0 0.0
        %195 = vmatpush.msra.mxu0 0.0
        %196 = vmatpush.msra.mxu0 0.0
        %197 = vmatpush.msra.mxu0 0.0
        %198 = vmatpush.msra.mxu0 0.0
        %199 = vmatpush.msra.mxu0 %v182
        %200 = vmatpush.msra.mxu0 %v181
        %201 = vmatpush.msra.mxu0 %v180
        %202 = vmatpush.msra.mxu0 %v179
        %203 = vmatmul.f32.gmra.mxu0 %v185
        %v204 = vpop.f32.mrf.mxu0
        %v205 = vadd.f32 0.0, %v204
        %206 = vdwg.mxu0
        %v207 = vmul.f32 %v205, 0.17677669
        %209 = vrot.lane.b32.xlu0 %v205, 112
        %v210 = vpop.permute.xlu0 %209
        %vm211 = vcmask 130048
        %v213 = vsel %vm211, %v207, 0
        %v215 = vsel %vm211, %v210, 0
        %217 = vmatpush.xpose.msra.mxu0 0.0
        %218 = vmatpush.xpose.msra.mxu0 0.0
        %219 = vmatpush.xpose.msra.mxu0 0.0
        %220 = vmatpush.xpose.msra.mxu0 0.0
        %221 = vmatpush.xpose.msra.mxu0 0.0
        %222 = vmatpush.xpose.msra.mxu0 0.0
        %223 = vmatpush.xpose.msra.mxu0 0.0
        %224 = vmatpush.xpose.msra.mxu0 0.0
        %225 = vmatpush.xpose.msra.mxu0 0.0
        %226 = vmatpush.xpose.msra.mxu0 0.0
        %227 = vmatpush.xpose.msra.mxu0 0.0
        %228 = vmatpush.xpose.msra.mxu0 0.0
        %229 = vmatpush.xpose.msra.mxu0 0.0
        %230 = vmatpush.xpose.msra.mxu0 0.0
        %231 = vmatpush.xpose.msra.mxu0 0.0
        %232 = vmatpush.xpose.msra.mxu0 %v215
        %233 = vmatmul.f32.gmra.mxu0 %v213
        %v234 = vpop.f32.mrf.mxu0
        %v235 = vadd.f32 0.0, %v234
        %236 = vdwg.mxu0
        %v237 = vlaneseq
        %v238 = vshrl.u32 %v237, 7
        %v239 = vlaneseq
        %v240 = vand.u32 %v239, 127
        %vm241 = vcmp.le.s32.totalorder %v240, %v238
        %v242 = vsel %vm241, %v235, -1e+30
        %vm243 = vcmask 64512
        %v244 = vsel %vm243, %v242, -inf
        %245 = vmax.xlane.f32.xlu0 %v244
        %v246 = vpop.xlane.xlu0 %245
        %v247 = vsub.f32 %v242, %v246
        %v248 = vmul.f32 %v247, 1.442695
        %v249 = vpow.pop %v248
        %v250 = vsel %vm243, %v249, 0.0
        %251 = vadd.xlane.f32.xlu0 %v250
        %v252 = vpop.xlane.xlu0 %251
        %v253 = vrcp.pop %v252
        %v254 = vmul.f32 %v252, %v253
        %v255 = vsub.f32 1.0, %v254
        %v256 = vmul.f32 %v253, %v255
        %v257 = vadd.f32 %v253, %v256
        %vm258 = vweird.f32 %v252
        %vm259 = vweird.f32 %v253
        %vm260 = vmor %vm258, %vm259
        %v261 = vsel %vm260, %v253, %v257
        %v262 = vand.u32 2147483647, %v252
        %vm263 = vcmp.eq.f32.partialorder %v262, 8.507059e+37
        %v264 = vand.u32 %v252, 2147483648
        %v265 = vor.u32 1.1754944e-38, %v264
        %v266 = vsel %vm263, %v265, %v261
        %v267 = vmul.f32 %v249, %v266
        %268 = vrot.lane.b32.xlu0 %v205, 96
        %v269 = vpop.permute.xlu0 %268
        %v272 = vsel %vm243, %v267, 0
        %274 = vmatpush.msra.mxu0 0.0
        %275 = vmatpush.msra.mxu0 0.0
        %276 = vmatpush.msra.mxu0 0.0
        %277 = vmatpush.msra.mxu0 0.0
        %278 = vmatpush.msra.mxu0 0.0
        %279 = vmatpush.msra.mxu0 0.0
        %280 = vmatpush.msra.mxu0 0.0
        %281 = vmatpush.msra.mxu0 0.0
        %282 = vmatpush.msra.mxu0 0.0
        %283 = vmatpush.msra.mxu0 0.0
        %284 = vmatpush.msra.mxu0 0.0
        %285 = vmatpush.msra.mxu0 0.0
        %286 = vmatpush.msra.mxu0 0.0
        %287 = vmatpush.msra.mxu0 0.0
        %288 = vmatpush.msra.mxu0 0.0
        %289 = vmatpush.msra.mxu0 %v269
        %290 = vmatmul.f32.gmra.mxu0 %v272
        %v291 = vpop.f32.mrf.mxu0
        %v292 = vadd.f32 0.0, %v291
        %293 = vdwg.mxu0
        %294 = vst.msk [vmem:[%s177] sm:$0xff] %vm211, %v292
        %s295 = sand.u32 %s75, 1
        %s296 = scalar_lea.sflag [#allocation4], %s295
        %s297 = sand.u32 %s75, 1
        %s298 = smul.addr %s297, 8
        %s299 = scalar_lea.vmem [#allocation7], %s298
        // Predicated region
        $region37: #{head_forward.1} parent=27 // pred_check
          %p300 = pneg %p85
        $region38: #{head_forward.1} parent=27 // pred_check_branch
          %302 = sbr.rel (%p300) target = $region40
        $region39: #{head_forward.1} parent=27 // pred_region
          %304 = vsyncadd %s296, 0
          %s305 = smul.addr %s20, 8
          %s306 = scalar_lea.hbm %s2, %s305
          %s308 = sshll.u32 %s299, 4
          %s309 = int_to_ptr.vmem [resolvable:$true] %s308
          %s310 = sshll.u32 %s306, 4
          %s311 = int_to_ptr.hbm [resolvable:$true] %s310
          %313 = dma.vmem_to_hbm [thread:$0]  %s309, 128, %s311, %s296
        $region40: #{head_forward.1} parent=27 // pred_fallthru
          _
      $region28: #{head_forward.1} parent=5 // pred_fallthru
        _
      %p314 = scmp.le.s32.totalorder 2, %s15
      // Predicated region
      $region41: #{head_forward.1} parent=5 // pred_check
        %p315 = pneg %p314
      $region42: #{head_forward.1} parent=5 // pred_check_branch
        %317 = sbr.rel (%p315) target = $region44
      $region43: #{head_forward.1} parent=5 // pred_region
        %s318 = ssub.s32 %s15, 2
        // Predicated region
        $region45: #{head_forward.1} parent=43 // pred_check
          %p319 = pneg %p91
        $region46: #{head_forward.1} parent=43 // pred_check_branch
          %321 = sbr.rel (%p319) target = $region48
        $region47: #{head_forward.1} parent=43 // pred_region
          %s322 = sand.u32 %s76, 1
          %s323 = scalar_lea.sflag [#allocation4], %s322
          %s324 = sand.u32 %s76, 1
          %s325 = smul.addr %s324, 8
          %s326 = scalar_lea.vmem [#allocation7], %s325
          %328 = dma.done %s323, 128
        $region48: #{head_forward.1} parent=43 // pred_fallthru
          _
      $region44: #{head_forward.1} parent=5 // pred_fallthru
        _
    $region6: #{head_forward.1} parent=1 // loop_footer
      %s19 = sadd.s32 1, %s15
    $region7: #{head_forward.1} parent=1 // loop_footer_branch
      %14 = sbr.rel target = $region3
    $region8: #{head_forward.1} parent=1 // loop_exit
      _
    %329 = vsyncpa [#allocation3], 1
    %s330 = scalar_lea.sflag [#allocation3], 1
    %331 = vsyncpa %s330, 1
    %332 = vsyncpa [#allocation6], 1
    %333 = vsyncpa [#allocation4], 1
    %s334 = scalar_lea.sflag [#allocation4], 1
    %335 = vsyncpa %s334, 1

</llo_original>
